<compile_context>
chip_gen: v6e
topology: v6e:2x2x1
jax: 0.10.0
libtpu: 0.0.40
codegen_flags: <defaults>
</compile_context>

<pallas_src>
import jax
import jax.numpy as jnp
from jax.experimental import pallas as pl
from jax.experimental.pallas import tpu as pltpu


def _round_up(x, m):
    return ((x + m - 1) // m) * m


def _tpu_info():
    try:
        return pltpu.get_tpu_info()
    except Exception:
        return None


def _num_tensorcores(info):
    if info is not None:
        for name in ("num_cores", "num_tensorcores", "num_tensor_cores",
                     "cores_per_chip"):
            v = getattr(info, name, None)
            if isinstance(v, int) and 1 <= v <= 8:
                return v
    # Unknown: a 2-way row split costs <1% on single-TC chips (one extra
    # accumulator re-zero + one extra (1, C) writeback) and is ~2x on v7x.
    return 2


def _choose_slab(n):
    """Pick a lane-dense (R, C) 2-D view of a flat length-n vector.

    Prefers a zero-copy view: C a multiple of 128 that divides n, with R >= 8.
    Falls back to zero-padding the flat vector to a multiple of 128 (and at
    least 8*128 elements).  Returns (n_padded, R, C); n_padded == n means the
    view is a free reshape (no HBM copy).
    """
    for c in (2048, 1024, 512, 256, 128):
        if n % c == 0 and (n // c) >= 8:
            return n, n // c, c
    c = 128
    n_pad = _round_up(max(n, 8 * c), c)
    return n_pad, n_pad // c, c


def _make_sse_kernel(*, tile_m, chunk_rows, lanes, valid_rows, needs_mask):
    """Kernel computing per-(sublane, lane) partial sums of squared errors."""
    n_chunks = tile_m // chunk_rows

    def kernel(o_ref, t_ref, out_ref, acc_ref):
        s = pl.program_id(0)
        j = pl.program_id(1)

        @pl.when(j == 0)
        def _():
            acc_ref[...] = jnp.zeros_like(acc_ref)

        row0 = (s * pl.num_programs(1) + j) * tile_m

        def fold_chunk(ci, carry):
            start = ci * chunk_rows
            o = o_ref[pl.ds(start, chunk_rows), :].astype(jnp.float32)
            t = t_ref[pl.ds(start, chunk_rows), :].astype(jnp.float32)
            d = o - t
            sq = d * d
            if needs_mask:
                # Rows past the (static) valid count belong to the ragged /
                # fully out-of-bounds boundary tiles and contain unspecified
                # data -> zero them.  Pure VPU work; the kernel is HBM-bound.
                rid = jax.lax.broadcasted_iota(jnp.int32, (chunk_rows, lanes), 0)
                sq = jnp.where(rid < valid_rows - row0 - start, sq, 0.0)
            # Fold onto the (8, lanes) accumulator: reduce only the leading
            # (non-sublane, non-lane) axis -> pure VPU adds, no XLU/scalar
            # reduction in the hot loop.
            acc_ref[...] += jnp.sum(sq.reshape(chunk_rows // 8, 8, lanes), axis=0)
            return carry

        jax.lax.fori_loop(0, n_chunks, fold_chunk, 0, unroll=True)

        @pl.when(j == pl.num_programs(1) - 1)
        def _():
            # Only a sublane reduce here (lane-dense (1, C) writeback); the
            # final cross-lane reduce of the tiny (n_splits, C) partials runs
            # in the wrapper.
            out_ref[...] = jnp.sum(acc_ref[...], axis=0, keepdims=True)

    return kernel


def elbo_forward(outputs, targets, kl, *, beta, num_params, block_bytes=16 << 20):
    """ELBO forward: MSE(outputs.squeeze(), targets) + beta * kl / num_params."""
    o = jnp.squeeze(jnp.asarray(outputs))  # mimics torch .squeeze()
    t = jnp.asarray(targets)
    # torch's MSELoss broadcasts (with a warning); mirror that so the
    # (1, D, 1)-outputs squeeze edge case still works.
    shape = jnp.broadcast_shapes(o.shape, t.shape)
    o = jnp.broadcast_to(o, shape).reshape(-1)
    t = jnp.broadcast_to(t, shape).reshape(-1)
    n_elems = int(o.size)
    assert n_elems > 0, "empty inputs"

    n_pad, R, C = _choose_slab(n_elems)
    if n_pad != n_elems:
        # No multiple-of-128 divides n_elems: minimal zero-pad of the flat
        # vector (zeros contribute nothing to the SSE).
        o = jnp.pad(o, (0, n_pad - n_elems))
        t = jnp.pad(t, (0, n_pad - n_elems))
    o2 = o.reshape(R, C)
    t2 = t.reshape(R, C)

    o_item = jnp.dtype(o2.dtype).itemsize
    t_item = jnp.dtype(t2.dtype).itemsize
    itm = o_item + t_item

    info = _tpu_info()
    cores = _num_tensorcores(info)

    # Row tile from an HBM-bandwidth-oriented budget: ~block_bytes of input
    # per grid step (the pipeline double-buffers it).
    tile_m = max(8, (block_bytes // (C * itm)) // 8 * 8)
    tile_m = min(tile_m, _round_up(R, 8))
    n_splits = cores if (cores > 1 and R >= 16 * cores) else 1
    if n_splits > 1:
        # Keep >=2 tiles per core so each core's inner loop stays pipelined.
        tile_m = min(tile_m, _round_up(pl.cdiv(R, 2 * n_splits), 8))
    # Fold each tile in <=8 chunks so the f32 diff/square temporaries stay
    # bounded (and are counted in the VMEM budget below).
    n_chunks = max(1, min(8, tile_m // 8))
    chunk_rows = max(8, (tile_m // n_chunks) // 8 * 8)
    tile_m = n_chunks * chunk_rows

    tiles_per_split = pl.cdiv(R, n_splits * tile_m)
    covered = n_splits * tiles_per_split * tile_m
    needs_mask = covered > R  # static: mask code only emitted when required

    kernel = _make_sse_kernel(tile_m=tile_m, chunk_rows=chunk_rows, lanes=C,
                              valid_rows=R, needs_mask=needs_mask)

    def in_idx(s, j):
        return (s * tiles_per_split + j, 0)

    vmem_needed = (2 * tile_m * C * itm            # double-buffered input blocks
                   + 5 * chunk_rows * C * 4        # diff/square/mask temporaries
                   + 8 * C * 4                     # accumulator
                   + 2 * n_splits * C * 4)         # output blocks
    vmem_limit = int(min(48 << 20, max(vmem_needed + (4 << 20), 32 << 20)))

    partials = pl.pallas_call(
        kernel,
        out_shape=jax.ShapeDtypeStruct((n_splits, C), jnp.float32),
        grid_spec=pltpu.PrefetchScalarGridSpec(
            num_scalar_prefetch=0,
            grid=(n_splits, tiles_per_split),
            in_specs=[
                pl.BlockSpec((tile_m, C), in_idx),   # outputs
                pl.BlockSpec((tile_m, C), in_idx),   # targets
            ],
            out_specs=pl.BlockSpec((1, C), lambda s, j: (s, 0)),
            scratch_shapes=[pltpu.VMEM((8, C), jnp.float32)],
        ),
        compiler_params=pltpu.CompilerParams(
            dimension_semantics=("parallel", "arbitrary"),
            vmem_limit_bytes=vmem_limit),
        cost_estimate=pl.CostEstimate(
            flops=3 * covered * C,
            transcendentals=0,
            bytes_accessed=n_pad * itm + n_splits * C * 4),
    )(o2, t2)

    sse = jnp.sum(partials)                        # tiny (n_splits, C) reduce
    mse = sse / jnp.float32(n_elems)
    kl32 = jnp.asarray(kl, dtype=jnp.float32)
    return mse + jnp.float32(beta) * kl32 / jnp.float32(num_params)


if __name__ == "__main__":
    key = jax.random.PRNGKey(0)
    k_o, k_t, k_kl = jax.random.split(key, 3)

    # Synthetic "model" parameter count (Linear(16->32) + Linear(32->1)),
    # mirroring ELBO.__init__'s sum of p.numel() over trainable params.
    num_params = 16 * 32 + 32 + 32 * 1 + 1  # = 577
    beta = 0.1
    train_size = 1000  # stored by the module but unused in forward

    kl = jnp.abs(jax.random.normal(k_kl, (), dtype=jnp.float32)) * 10.0

    def ref_loss(o, t):
        return (jnp.mean((jnp.squeeze(o).astype(jnp.float32)
                          - t.astype(jnp.float32)) ** 2)
                + beta * kl / num_params)

    # Case 1: (M, D, 1) outputs vs (M, D) targets; element count divisible by
    # 128 -> zero-copy lane-dense slab.
    M, D = 256, 128
    o1 = jax.random.normal(k_o, (M, D, 1), dtype=jnp.float32)
    t1 = jax.random.normal(k_t, (M, D), dtype=jnp.float32)
    l1 = jax.block_until_ready(
        elbo_forward(o1, t1, kl, beta=beta, num_params=num_params))
    r1 = ref_loss(o1, t1)
    assert jnp.allclose(l1, r1, rtol=1e-5, atol=1e-5), (l1, r1)

    # Case 2: regression-style (batch, 1) outputs vs (batch,) targets with a
    # batch not a multiple of 128 -> minimal flat zero-pad fallback path.
    B = 200
    o2 = jax.random.normal(k_o, (B, 1), dtype=jnp.float32)
    t2 = jax.random.normal(k_t, (B,), dtype=jnp.float32)
    l2 = jax.block_until_ready(
        elbo_forward(o2, t2, kl, beta=beta, num_params=num_params))
    r2 = ref_loss(o2, t2)
    assert jnp.allclose(l2, r2, rtol=1e-5, atol=1e-5), (l2, r2)

    # Case 3: N = 200*128 -> zero-copy slab (C=1024, R=25) with a ragged last
    # row tile and a multi-step grid (small block budget) -> exercises the
    # in-kernel tail masking (no wrapper row padding).
    M3, D3 = 200, 128
    o3 = jax.random.normal(k_o, (M3, D3, 1), dtype=jnp.float32)
    t3 = jax.random.normal(k_t, (M3, D3), dtype=jnp.float32)
    l3 = jax.block_until_ready(
        elbo_forward(o3, t3, kl, beta=beta, num_params=num_params,
                     block_bytes=64 * 1024))
    r3 = ref_loss(o3, t3)
    assert jnp.allclose(l3, r3, rtol=1e-5, atol=1e-5), (l3, r3)

    print("KERNEL_OK")
</pallas_src>

<mosaic_0001>
module attributes {stable_mosaic.version = 11 : i64} {
  func.func @kernel(%arg0: i32, %arg1: i32, %arg2: memref<16x2048xf32, #tpu.memory_space<vmem>>, %arg3: memref<16x2048xf32, #tpu.memory_space<vmem>>, %arg4: memref<1x2048xf32, #tpu.memory_space<vmem>>, %arg5: memref<8x2048xf32, #tpu.memory_space<vmem>>) attributes {dimension_semantics = [#tpu.dimension_semantics<parallel>, #tpu.dimension_semantics<arbitrary>], iteration_bounds = array<i64: 1, 1>, scalar_prefetch = 0 : i64, scratch_operands = 1 : i64, tpu.core_type = #tpu.core_type<tc>, window_params = [{transform_indices = @transform_0, window_bounds = array<i64: 16, 2048>}, {transform_indices = @transform_1, window_bounds = array<i64: 16, 2048>}, {transform_indices = @transform_2, window_bounds = array<i64: 1, 2048>}]} {
    %c0_i32 = arith.constant 0 : i32
    %0 = arith.cmpi eq, %arg1, %c0_i32 : i32
    %1 = arith.extui %0 : i1 to i32
    %c0_i32_0 = arith.constant 0 : i32
    %2 = arith.cmpi ne, %1, %c0_i32_0 : i32
    scf.if %2 {
      %cst_17 = arith.constant 0.000000e+00 : f32
      %30 = vector.broadcast %cst_17 : f32 to vector<8x2048xf32>
      %c0_18 = arith.constant 0 : index
      %c0_19 = arith.constant 0 : index
      %31 = vector.load %arg5[%c0_18, %c0_19] : memref<8x2048xf32, #tpu.memory_space<vmem>>, vector<8x2048xf32>
      tpu.vector_store %arg5[%c0_18, %c0_19], %30 {strides = array<i32>} : memref<8x2048xf32, #tpu.memory_space<vmem>>, vector<8x2048xf32>,
    } else {
    }
    %c0_i32_1 = arith.constant 0 : i32
    %c8_i32 = arith.constant 8 : i32
    %3 = arith.muli %c0_i32_1, %c8_i32 : i32
    %4 = arith.index_cast %3 : i32 to index
    %c0 = arith.constant 0 : index
    %5 = vector.load %arg2[%4, %c0] : memref<16x2048xf32, #tpu.memory_space<vmem>>, vector<8x2048xf32>
    %6 = arith.index_cast %3 : i32 to index
    %c0_2 = arith.constant 0 : index
    %7 = vector.load %arg3[%6, %c0_2] : memref<16x2048xf32, #tpu.memory_space<vmem>>, vector<8x2048xf32>
    %8 = arith.subf %5, %7 : vector<8x2048xf32>
    %9 = arith.mulf %8, %8 : vector<8x2048xf32>
    %c0_3 = arith.constant 0 : index
    %c0_4 = arith.constant 0 : index
    %10 = vector.load %arg5[%c0_3, %c0_4] : memref<8x2048xf32, #tpu.memory_space<vmem>>, vector<8x2048xf32>
    %11 = vector.shape_cast %9 : vector<8x2048xf32> to vector<1x8x2048xf32>
    %cst = arith.constant dense<0.000000e+00> : vector<8x2048xf32>
    %12 = vector.multi_reduction <add>, %11, %cst [0] : vector<1x8x2048xf32> to vector<8x2048xf32>
    %13 = arith.addf %10, %12 : vector<8x2048xf32>
    %c0_5 = arith.constant 0 : index
    %c0_6 = arith.constant 0 : index
    %14 = vector.load %arg5[%c0_5, %c0_6] : memref<8x2048xf32, #tpu.memory_space<vmem>>, vector<8x2048xf32>
    tpu.vector_store %arg5[%c0_5, %c0_6], %13 {strides = array<i32>} : memref<8x2048xf32, #tpu.memory_space<vmem>>, vector<8x2048xf32>,
    %c1_i32 = arith.constant 1 : i32
    %c8_i32_7 = arith.constant 8 : i32
    %15 = arith.muli %c1_i32, %c8_i32_7 : i32
    %16 = arith.index_cast %15 : i32 to index
    %c0_8 = arith.constant 0 : index
    %17 = vector.load %arg2[%16, %c0_8] : memref<16x2048xf32, #tpu.memory_space<vmem>>, vector<8x2048xf32>
    %18 = arith.index_cast %15 : i32 to index
    %c0_9 = arith.constant 0 : index
    %19 = vector.load %arg3[%18, %c0_9] : memref<16x2048xf32, #tpu.memory_space<vmem>>, vector<8x2048xf32>
    %20 = arith.subf %17, %19 : vector<8x2048xf32>
    %21 = arith.mulf %20, %20 : vector<8x2048xf32>
    %c0_10 = arith.constant 0 : index
    %c0_11 = arith.constant 0 : index
    %22 = vector.load %arg5[%c0_10, %c0_11] : memref<8x2048xf32, #tpu.memory_space<vmem>>, vector<8x2048xf32>
    %23 = vector.shape_cast %21 : vector<8x2048xf32> to vector<1x8x2048xf32>
    %cst_12 = arith.constant dense<0.000000e+00> : vector<8x2048xf32>
    %24 = vector.multi_reduction <add>, %23, %cst_12 [0] : vector<1x8x2048xf32> to vector<8x2048xf32>
    %25 = arith.addf %22, %24 : vector<8x2048xf32>
    %c0_13 = arith.constant 0 : index
    %c0_14 = arith.constant 0 : index
    %26 = vector.load %arg5[%c0_13, %c0_14] : memref<8x2048xf32, #tpu.memory_space<vmem>>, vector<8x2048xf32>
    tpu.vector_store %arg5[%c0_13, %c0_14], %25 {strides = array<i32>} : memref<8x2048xf32, #tpu.memory_space<vmem>>, vector<8x2048xf32>,
    %c2_i32 = arith.constant 2 : i32
    %c0_i32_15 = arith.constant 0 : i32
    %27 = arith.cmpi eq, %arg1, %c0_i32_15 : i32
    %28 = arith.extui %27 : i1 to i32
    %c0_i32_16 = arith.constant 0 : i32
    %29 = arith.cmpi ne, %28, %c0_i32_16 : i32
    scf.if %29 {
      %c0_17 = arith.constant 0 : index
      %c0_18 = arith.constant 0 : index
      %30 = vector.load %arg5[%c0_17, %c0_18] : memref<8x2048xf32, #tpu.memory_space<vmem>>, vector<8x2048xf32>
      %cst_19 = arith.constant dense<0.000000e+00> : vector<2048xf32>
      %31 = vector.multi_reduction <add>, %30, %cst_19 [0] : vector<8x2048xf32> to vector<2048xf32>
      %32 = vector.shape_cast %31 : vector<2048xf32> to vector<1x2048xf32>
      %c0_20 = arith.constant 0 : index
      %c0_21 = arith.constant 0 : index
      %33 = vector.load %arg4[%c0_20, %c0_21] : memref<1x2048xf32, #tpu.memory_space<vmem>>, vector<1x2048xf32>
      tpu.vector_store %arg4[%c0_20, %c0_21], %32 {strides = array<i32>} : memref<1x2048xf32, #tpu.memory_space<vmem>>, vector<1x2048xf32>,
    } else {
    }
    return
  }
  func.func @transform_0(%arg0: i32, %arg1: i32) -> (i32, i32) {
    %c1_i32 = arith.constant 1 : i32
    %0 = arith.muli %arg0, %c1_i32 : i32
    %1 = arith.addi %0, %arg1 : i32
    %c0_i32 = arith.constant 0 : i32
    %c0_i32_0 = arith.constant 0 : i32
    return %1, %c0_i32 : i32, i32
  }
  func.func @transform_1(%arg0: i32, %arg1: i32) -> (i32, i32) {
    %c1_i32 = arith.constant 1 : i32
    %0 = arith.muli %arg0, %c1_i32 : i32
    %1 = arith.addi %0, %arg1 : i32
    %c0_i32 = arith.constant 0 : i32
    %c0_i32_0 = arith.constant 0 : i32
    return %1, %c0_i32 : i32, i32
  }
  func.func @transform_2(%arg0: i32, %arg1: i32) -> (i32, i32) {
    %c0_i32 = arith.constant 0 : i32
    %c0_i32_0 = arith.constant 0 : i32
    return %arg0, %c0_i32 : i32, i32
  }
}

</mosaic_0001>

<llo_original>
// kernel: tpu_custom_call.1
$region0: #{tpu_custom_call.1}
  #allocation0 [shape = 'u32[]', space=smem, size = 0x4, offset = 0x4, fixed_abs, tag = 'smem constant byte address 0x4 - core index']
  #allocation1 [shape = 'u32[144,128]{1,0:T(1,128)}', space=vmem, size = 0x12000, scoped, tag = 'internal scratch']
  #allocation2 [shape = 'f32[8,2048]{1,0:T(8,128)}', space=vmem, size = 0x10000, scoped, tag = 'scratch operand']
  %s0 = inlined_call_operand.hbm [shape: f32[16,2048], index: 0, kind: input, shape index: {}]
  %s1 = inlined_call_operand.hbm [shape: f32[16,2048], index: 1, kind: input, shape index: {}]
  %s2 = inlined_call_operand.hbm [shape: f32[1,2048], index: 2, kind: output, shape index: {}]
  %s3 = sld [smem:[#allocation0]]
  $region34: #{tpu_custom_call.1} parent=0
    _
  %s5 = ssub.s32 1, %s3
  %s6 = scalar_select 0, %s5, %s3
  $region1: #{tpu_custom_call.1} parent=0
    #allocation3 [shape = 'u8[131072]{0}', space=vmem, size = 0x20000, scoped, tag = 'input window, operand 0, single buffered']
    #allocation4 [shape = 's32[1]{0}', space=sflag, size = 0x4, scoped, tag = 'scoped memory for tpu_custom_call.1']
    #allocation5 [shape = 's32[1]{0}', space=sflag, size = 0x4, scoped, tag = 'scoped memory for tpu_custom_call.1']
    #allocation6 [shape = 'u8[131072]{0}', space=vmem, size = 0x20000, scoped, tag = 'input window, operand 1, single buffered']
    #allocation7 [shape = 's32[1]{0}', space=sflag, size = 0x4, scoped, tag = 'scoped memory for tpu_custom_call.1']
    #allocation8 [shape = 'u8[8192]{0}', space=vmem, size = 0x2000, scoped, tag = 'output window, operand 0, single buffered']
    %7 = vsyncpa [#allocation4], 0
    %8 = vsyncpa [#allocation7], 0
    %9 = vsyncpa [#allocation5], 0
    // Predicated region
    $region2: #{tpu_custom_call.1} parent=1 // pred_check
      _
    $region3: #{tpu_custom_call.1} parent=1 // pred_check_branch
      %11 = sbr.rel (0) target = $region5
    $region4: #{tpu_custom_call.1} parent=1 // pred_region
      %s12 = sadd.s32 0, 0
      %s13 = smul.u32 2, %s12
      %s15 = ssub.s32 4096, 4096
      %16 = vsyncadd [#allocation4], %s15
      %s17 = smul.addr %s13, 16
      %s18 = smul.addr %s17, 128
      %s19 = scalar_lea.hbm %s0, %s18
      %s20 = sshll.u32 [#allocation3], 4
      %s21 = int_to_ptr.vmem [resolvable:$true] %s20
      %26 = dma.hbm_to_vmem [thread:$0]  %s19, 4096, %s21, [#allocation4], 2048, 2048, 128
    $region5: #{tpu_custom_call.1} parent=1 // pred_fallthru
      _
    // Predicated region
    $region6: #{tpu_custom_call.1} parent=1 // pred_check
      _
    $region7: #{tpu_custom_call.1} parent=1 // pred_check_branch
      %28 = sbr.rel (0) target = $region9
    $region8: #{tpu_custom_call.1} parent=1 // pred_region
      %s29 = sadd.s32 0, 0
      %s30 = smul.u32 2, %s29
      %s32 = ssub.s32 4096, 4096
      %33 = vsyncadd [#allocation7], %s32
      %s34 = smul.addr %s30, 16
      %s35 = smul.addr %s34, 128
      %s36 = scalar_lea.hbm %s1, %s35
      %s37 = sshll.u32 [#allocation6], 4
      %s38 = int_to_ptr.vmem [resolvable:$true] %s37
      %43 = dma.hbm_to_vmem [thread:$0]  %s36, 4096, %s38, [#allocation7], 2048, 2048, 128
    $region9: #{tpu_custom_call.1} parent=1 // pred_fallthru
      _
    // Predicated region
    $region10: #{tpu_custom_call.1} parent=1 // pred_check
      _
    $region11: #{tpu_custom_call.1} parent=1 // pred_check_branch
      %45 = sbr.rel (0) target = $region13
    $region12: #{tpu_custom_call.1} parent=1 // pred_region
      %46 = dma.done [#allocation4], 4096
    $region13: #{tpu_custom_call.1} parent=1 // pred_fallthru
      _
    // Predicated region
    $region14: #{tpu_custom_call.1} parent=1 // pred_check
      _
    $region15: #{tpu_custom_call.1} parent=1 // pred_check_branch
      %48 = sbr.rel (0) target = $region17
    $region16: #{tpu_custom_call.1} parent=1 // pred_region
      %49 = dma.done [#allocation7], 4096
    $region17: #{tpu_custom_call.1} parent=1 // pred_fallthru
      _
    %s50 = sadd.s32 0, 0
    %s51 = smul.u32 2, %s50
    %s52 = sadd.s32 0, 0
    %s53 = smul.u32 2, %s52
    %p54 = scmp.eq.s32.totalorder 0, 0
    // Predicated region
    $region18: #{tpu_custom_call.1} parent=1 // pred_check
      %p55 = pneg %p54
    $region19: #{tpu_custom_call.1} parent=1 // pred_check_branch
      %57 = sbr.rel (%p55) target = $region21
    $region20: #{tpu_custom_call.1} parent=1 // pred_region
      %58 = vst [vmem:[#allocation2] sm:$0xff] 0.0
      %59 = vst [vmem:[#allocation2 + $0x8] sm:$0xff] 0.0
      %60 = vst [vmem:[#allocation2 + $0x10] sm:$0xff] 0.0
      %61 = vst [vmem:[#allocation2 + $0x18] sm:$0xff] 0.0
      %62 = vst [vmem:[#allocation2 + $0x20] sm:$0xff] 0.0
      %63 = vst [vmem:[#allocation2 + $0x28] sm:$0xff] 0.0
      %64 = vst [vmem:[#allocation2 + $0x30] sm:$0xff] 0.0
      %65 = vst [vmem:[#allocation2 + $0x38] sm:$0xff] 0.0
      %66 = vst [vmem:[#allocation2 + $0x40] sm:$0xff] 0.0
      %67 = vst [vmem:[#allocation2 + $0x48] sm:$0xff] 0.0
      %68 = vst [vmem:[#allocation2 + $0x50] sm:$0xff] 0.0
      %69 = vst [vmem:[#allocation2 + $0x58] sm:$0xff] 0.0
      %70 = vst [vmem:[#allocation2 + $0x60] sm:$0xff] 0.0
      %71 = vst [vmem:[#allocation2 + $0x68] sm:$0xff] 0.0
      %72 = vst [vmem:[#allocation2 + $0x70] sm:$0xff] 0.0
      %73 = vst [vmem:[#allocation2 + $0x78] sm:$0xff] 0.0
    $region21: #{tpu_custom_call.1} parent=1 // pred_fallthru
      _
    %v74 = vld [vmem:[#allocation3] sm:$0xff]
    %v75 = vld [vmem:[#allocation3 + $0x8] sm:$0xff]
    %v76 = vld [vmem:[#allocation3 + $0x10] sm:$0xff]
    %v77 = vld [vmem:[#allocation3 + $0x18] sm:$0xff]
    %v78 = vld [vmem:[#allocation3 + $0x20] sm:$0xff]
    %v79 = vld [vmem:[#allocation3 + $0x28] sm:$0xff]
    %v80 = vld [vmem:[#allocation3 + $0x30] sm:$0xff]
    %v81 = vld [vmem:[#allocation3 + $0x38] sm:$0xff]
    %v82 = vld [vmem:[#allocation3 + $0x40] sm:$0xff]
    %v83 = vld [vmem:[#allocation3 + $0x48] sm:$0xff]
    %v84 = vld [vmem:[#allocation3 + $0x50] sm:$0xff]
    %v85 = vld [vmem:[#allocation3 + $0x58] sm:$0xff]
    %v86 = vld [vmem:[#allocation3 + $0x60] sm:$0xff]
    %v87 = vld [vmem:[#allocation3 + $0x68] sm:$0xff]
    %v88 = vld [vmem:[#allocation3 + $0x70] sm:$0xff]
    %v89 = vld [vmem:[#allocation3 + $0x78] sm:$0xff]
    %v90 = vld [vmem:[#allocation6] sm:$0xff]
    %v91 = vld [vmem:[#allocation6 + $0x8] sm:$0xff]
    %v92 = vld [vmem:[#allocation6 + $0x10] sm:$0xff]
    %v93 = vld [vmem:[#allocation6 + $0x18] sm:$0xff]
    %v94 = vld [vmem:[#allocation6 + $0x20] sm:$0xff]
    %v95 = vld [vmem:[#allocation6 + $0x28] sm:$0xff]
    %v96 = vld [vmem:[#allocation6 + $0x30] sm:$0xff]
    %v97 = vld [vmem:[#allocation6 + $0x38] sm:$0xff]
    %v98 = vld [vmem:[#allocation6 + $0x40] sm:$0xff]
    %v99 = vld [vmem:[#allocation6 + $0x48] sm:$0xff]
    %v100 = vld [vmem:[#allocation6 + $0x50] sm:$0xff]
    %v101 = vld [vmem:[#allocation6 + $0x58] sm:$0xff]
    %v102 = vld [vmem:[#allocation6 + $0x60] sm:$0xff]
    %v103 = vld [vmem:[#allocation6 + $0x68] sm:$0xff]
    %v104 = vld [vmem:[#allocation6 + $0x70] sm:$0xff]
    %v105 = vld [vmem:[#allocation6 + $0x78] sm:$0xff]
    %v106 = vsub.f32 %v74, %v90
    %v107 = vsub.f32 %v75, %v91
    %v108 = vsub.f32 %v76, %v92
    %v109 = vsub.f32 %v77, %v93
    %v110 = vsub.f32 %v78, %v94
    %v111 = vsub.f32 %v79, %v95
    %v112 = vsub.f32 %v80, %v96
    %v113 = vsub.f32 %v81, %v97
    %v114 = vsub.f32 %v82, %v98
    %v115 = vsub.f32 %v83, %v99
    %v116 = vsub.f32 %v84, %v100
    %v117 = vsub.f32 %v85, %v101
    %v118 = vsub.f32 %v86, %v102
    %v119 = vsub.f32 %v87, %v103
    %v120 = vsub.f32 %v88, %v104
    %v121 = vsub.f32 %v89, %v105
    %v122 = vmul.f32 %v106, %v106
    %v123 = vmul.f32 %v107, %v107
    %v124 = vmul.f32 %v108, %v108
    %v125 = vmul.f32 %v109, %v109
    %v126 = vmul.f32 %v110, %v110
    %v127 = vmul.f32 %v111, %v111
    %v128 = vmul.f32 %v112, %v112
    %v129 = vmul.f32 %v113, %v113
    %v130 = vmul.f32 %v114, %v114
    %v131 = vmul.f32 %v115, %v115
    %v132 = vmul.f32 %v116, %v116
    %v133 = vmul.f32 %v117, %v117
    %v134 = vmul.f32 %v118, %v118
    %v135 = vmul.f32 %v119, %v119
    %v136 = vmul.f32 %v120, %v120
    %v137 = vmul.f32 %v121, %v121
    %v138 = vld [vmem:[#allocation2] sm:$0xff]
    %v139 = vld [vmem:[#allocation2 + $0x8] sm:$0xff]
    %v140 = vld [vmem:[#allocation2 + $0x10] sm:$0xff]
    %v141 = vld [vmem:[#allocation2 + $0x18] sm:$0xff]
    %v142 = vld [vmem:[#allocation2 + $0x20] sm:$0xff]
    %v143 = vld [vmem:[#allocation2 + $0x28] sm:$0xff]
    %v144 = vld [vmem:[#allocation2 + $0x30] sm:$0xff]
    %v145 = vld [vmem:[#allocation2 + $0x38] sm:$0xff]
    %v146 = vld [vmem:[#allocation2 + $0x40] sm:$0xff]
    %v147 = vld [vmem:[#allocation2 + $0x48] sm:$0xff]
    %v148 = vld [vmem:[#allocation2 + $0x50] sm:$0xff]
    %v149 = vld [vmem:[#allocation2 + $0x58] sm:$0xff]
    %v150 = vld [vmem:[#allocation2 + $0x60] sm:$0xff]
    %v151 = vld [vmem:[#allocation2 + $0x68] sm:$0xff]
    %v152 = vld [vmem:[#allocation2 + $0x70] sm:$0xff]
    %v153 = vld [vmem:[#allocation2 + $0x78] sm:$0xff]
    %v154 = vadd.f32 %v122, 0.0
    %v155 = vadd.f32 %v123, 0.0
    %v156 = vadd.f32 %v124, 0.0
    %v157 = vadd.f32 %v125, 0.0
    %v158 = vadd.f32 %v126, 0.0
    %v159 = vadd.f32 %v127, 0.0
    %v160 = vadd.f32 %v128, 0.0
    %v161 = vadd.f32 %v129, 0.0
    %v162 = vadd.f32 %v130, 0.0
    %v163 = vadd.f32 %v131, 0.0
    %v164 = vadd.f32 %v132, 0.0
    %v165 = vadd.f32 %v133, 0.0
    %v166 = vadd.f32 %v134, 0.0
    %v167 = vadd.f32 %v135, 0.0
    %v168 = vadd.f32 %v136, 0.0
    %v169 = vadd.f32 %v137, 0.0
    %v170 = vadd.f32 %v138, %v154
    %v171 = vadd.f32 %v139, %v155
    %v172 = vadd.f32 %v140, %v156
    %v173 = vadd.f32 %v141, %v157
    %v174 = vadd.f32 %v142, %v158
    %v175 = vadd.f32 %v143, %v159
    %v176 = vadd.f32 %v144, %v160
    %v177 = vadd.f32 %v145, %v161
    %v178 = vadd.f32 %v146, %v162
    %v179 = vadd.f32 %v147, %v163
    %v180 = vadd.f32 %v148, %v164
    %v181 = vadd.f32 %v149, %v165
    %v182 = vadd.f32 %v150, %v166
    %v183 = vadd.f32 %v151, %v167
    %v184 = vadd.f32 %v152, %v168
    %v185 = vadd.f32 %v153, %v169
    %186 = vst [vmem:[#allocation2] sm:$0xff] %v170
    %187 = vst [vmem:[#allocation2 + $0x8] sm:$0xff] %v171
    %188 = vst [vmem:[#allocation2 + $0x10] sm:$0xff] %v172
    %189 = vst [vmem:[#allocation2 + $0x18] sm:$0xff] %v173
    %190 = vst [vmem:[#allocation2 + $0x20] sm:$0xff] %v174
    %191 = vst [vmem:[#allocation2 + $0x28] sm:$0xff] %v175
    %192 = vst [vmem:[#allocation2 + $0x30] sm:$0xff] %v176
    %193 = vst [vmem:[#allocation2 + $0x38] sm:$0xff] %v177
    %194 = vst [vmem:[#allocation2 + $0x40] sm:$0xff] %v178
    %195 = vst [vmem:[#allocation2 + $0x48] sm:$0xff] %v179
    %196 = vst [vmem:[#allocation2 + $0x50] sm:$0xff] %v180
    %197 = vst [vmem:[#allocation2 + $0x58] sm:$0xff] %v181
    %198 = vst [vmem:[#allocation2 + $0x60] sm:$0xff] %v182
    %199 = vst [vmem:[#allocation2 + $0x68] sm:$0xff] %v183
    %200 = vst [vmem:[#allocation2 + $0x70] sm:$0xff] %v184
    %201 = vst [vmem:[#allocation2 + $0x78] sm:$0xff] %v185
    %v202 = vld [vmem:[#allocation3 + $0x80] sm:$0xff]
    %v203 = vld [vmem:[#allocation3 + $0x88] sm:$0xff]
    %v204 = vld [vmem:[#allocation3 + $0x90] sm:$0xff]
    %v205 = vld [vmem:[#allocation3 + $0x98] sm:$0xff]
    %v206 = vld [vmem:[#allocation3 + $0xa0] sm:$0xff]
    %v207 = vld [vmem:[#allocation3 + $0xa8] sm:$0xff]
    %v208 = vld [vmem:[#allocation3 + $0xb0] sm:$0xff]
    %v209 = vld [vmem:[#allocation3 + $0xb8] sm:$0xff]
    %v210 = vld [vmem:[#allocation3 + $0xc0] sm:$0xff]
    %v211 = vld [vmem:[#allocation3 + $0xc8] sm:$0xff]
    %v212 = vld [vmem:[#allocation3 + $0xd0] sm:$0xff]
    %v213 = vld [vmem:[#allocation3 + $0xd8] sm:$0xff]
    %v214 = vld [vmem:[#allocation3 + $0xe0] sm:$0xff]
    %v215 = vld [vmem:[#allocation3 + $0xe8] sm:$0xff]
    %v216 = vld [vmem:[#allocation3 + $0xf0] sm:$0xff]
    %v217 = vld [vmem:[#allocation3 + $0xf8] sm:$0xff]
    %v218 = vld [vmem:[#allocation6 + $0x80] sm:$0xff]
    %v219 = vld [vmem:[#allocation6 + $0x88] sm:$0xff]
    %v220 = vld [vmem:[#allocation6 + $0x90] sm:$0xff]
    %v221 = vld [vmem:[#allocation6 + $0x98] sm:$0xff]
    %v222 = vld [vmem:[#allocation6 + $0xa0] sm:$0xff]
    %v223 = vld [vmem:[#allocation6 + $0xa8] sm:$0xff]
    %v224 = vld [vmem:[#allocation6 + $0xb0] sm:$0xff]
    %v225 = vld [vmem:[#allocation6 + $0xb8] sm:$0xff]
    %v226 = vld [vmem:[#allocation6 + $0xc0] sm:$0xff]
    %v227 = vld [vmem:[#allocation6 + $0xc8] sm:$0xff]
    %v228 = vld [vmem:[#allocation6 + $0xd0] sm:$0xff]
    %v229 = vld [vmem:[#allocation6 + $0xd8] sm:$0xff]
    %v230 = vld [vmem:[#allocation6 + $0xe0] sm:$0xff]
    %v231 = vld [vmem:[#allocation6 + $0xe8] sm:$0xff]
    %v232 = vld [vmem:[#allocation6 + $0xf0] sm:$0xff]
    %v233 = vld [vmem:[#allocation6 + $0xf8] sm:$0xff]
    %v234 = vsub.f32 %v202, %v218
    %v235 = vsub.f32 %v203, %v219
    %v236 = vsub.f32 %v204, %v220
    %v237 = vsub.f32 %v205, %v221
    %v238 = vsub.f32 %v206, %v222
    %v239 = vsub.f32 %v207, %v223
    %v240 = vsub.f32 %v208, %v224
    %v241 = vsub.f32 %v209, %v225
    %v242 = vsub.f32 %v210, %v226
    %v243 = vsub.f32 %v211, %v227
    %v244 = vsub.f32 %v212, %v228
    %v245 = vsub.f32 %v213, %v229
    %v246 = vsub.f32 %v214, %v230
    %v247 = vsub.f32 %v215, %v231
    %v248 = vsub.f32 %v216, %v232
    %v249 = vsub.f32 %v217, %v233
    %v250 = vmul.f32 %v234, %v234
    %v251 = vmul.f32 %v235, %v235
    %v252 = vmul.f32 %v236, %v236
    %v253 = vmul.f32 %v237, %v237
    %v254 = vmul.f32 %v238, %v238
    %v255 = vmul.f32 %v239, %v239
    %v256 = vmul.f32 %v240, %v240
    %v257 = vmul.f32 %v241, %v241
    %v258 = vmul.f32 %v242, %v242
    %v259 = vmul.f32 %v243, %v243
    %v260 = vmul.f32 %v244, %v244
    %v261 = vmul.f32 %v245, %v245
    %v262 = vmul.f32 %v246, %v246
    %v263 = vmul.f32 %v247, %v247
    %v264 = vmul.f32 %v248, %v248
    %v265 = vmul.f32 %v249, %v249
    %v266 = vld [vmem:[#allocation2] sm:$0xff]
    %v267 = vld [vmem:[#allocation2 + $0x8] sm:$0xff]
    %v268 = vld [vmem:[#allocation2 + $0x10] sm:$0xff]
    %v269 = vld [vmem:[#allocation2 + $0x18] sm:$0xff]
    %v270 = vld [vmem:[#allocation2 + $0x20] sm:$0xff]
    %v271 = vld [vmem:[#allocation2 + $0x28] sm:$0xff]
    %v272 = vld [vmem:[#allocation2 + $0x30] sm:$0xff]
    %v273 = vld [vmem:[#allocation2 + $0x38] sm:$0xff]
    %v274 = vld [vmem:[#allocation2 + $0x40] sm:$0xff]
    %v275 = vld [vmem:[#allocation2 + $0x48] sm:$0xff]
    %v276 = vld [vmem:[#allocation2 + $0x50] sm:$0xff]
    %v277 = vld [vmem:[#allocation2 + $0x58] sm:$0xff]
    %v278 = vld [vmem:[#allocation2 + $0x60] sm:$0xff]
    %v279 = vld [vmem:[#allocation2 + $0x68] sm:$0xff]
    %v280 = vld [vmem:[#allocation2 + $0x70] sm:$0xff]
    %v281 = vld [vmem:[#allocation2 + $0x78] sm:$0xff]
    %v282 = vadd.f32 %v250, 0.0
    %v283 = vadd.f32 %v251, 0.0
    %v284 = vadd.f32 %v252, 0.0
    %v285 = vadd.f32 %v253, 0.0
    %v286 = vadd.f32 %v254, 0.0
    %v287 = vadd.f32 %v255, 0.0
    %v288 = vadd.f32 %v256, 0.0
    %v289 = vadd.f32 %v257, 0.0
    %v290 = vadd.f32 %v258, 0.0
    %v291 = vadd.f32 %v259, 0.0
    %v292 = vadd.f32 %v260, 0.0
    %v293 = vadd.f32 %v261, 0.0
    %v294 = vadd.f32 %v262, 0.0
    %v295 = vadd.f32 %v263, 0.0
    %v296 = vadd.f32 %v264, 0.0
    %v297 = vadd.f32 %v265, 0.0
    %v298 = vadd.f32 %v266, %v282
    %v299 = vadd.f32 %v267, %v283
    %v300 = vadd.f32 %v268, %v284
    %v301 = vadd.f32 %v269, %v285
    %v302 = vadd.f32 %v270, %v286
    %v303 = vadd.f32 %v271, %v287
    %v304 = vadd.f32 %v272, %v288
    %v305 = vadd.f32 %v273, %v289
    %v306 = vadd.f32 %v274, %v290
    %v307 = vadd.f32 %v275, %v291
    %v308 = vadd.f32 %v276, %v292
    %v309 = vadd.f32 %v277, %v293
    %v310 = vadd.f32 %v278, %v294
    %v311 = vadd.f32 %v279, %v295
    %v312 = vadd.f32 %v280, %v296
    %v313 = vadd.f32 %v281, %v297
    %314 = vst [vmem:[#allocation2] sm:$0xff] %v298
    %315 = vst [vmem:[#allocation2 + $0x8] sm:$0xff] %v299
    %316 = vst [vmem:[#allocation2 + $0x10] sm:$0xff] %v300
    %317 = vst [vmem:[#allocation2 + $0x18] sm:$0xff] %v301
    %318 = vst [vmem:[#allocation2 + $0x20] sm:$0xff] %v302
    %319 = vst [vmem:[#allocation2 + $0x28] sm:$0xff] %v303
    %320 = vst [vmem:[#allocation2 + $0x30] sm:$0xff] %v304
    %321 = vst [vmem:[#allocation2 + $0x38] sm:$0xff] %v305
    %322 = vst [vmem:[#allocation2 + $0x40] sm:$0xff] %v306
    %323 = vst [vmem:[#allocation2 + $0x48] sm:$0xff] %v307
    %324 = vst [vmem:[#allocation2 + $0x50] sm:$0xff] %v308
    %325 = vst [vmem:[#allocation2 + $0x58] sm:$0xff] %v309
    %326 = vst [vmem:[#allocation2 + $0x60] sm:$0xff] %v310
    %327 = vst [vmem:[#allocation2 + $0x68] sm:$0xff] %v311
    %328 = vst [vmem:[#allocation2 + $0x70] sm:$0xff] %v312
    %329 = vst [vmem:[#allocation2 + $0x78] sm:$0xff] %v313
    // Predicated region
    $region22: #{tpu_custom_call.1} parent=1 // pred_check
      %p330 = pneg %p54
    $region23: #{tpu_custom_call.1} parent=1 // pred_check_branch
      %332 = sbr.rel (%p330) target = $region25
    $region24: #{tpu_custom_call.1} parent=1 // pred_region
      %v333 = vld [vmem:[#allocation2] sm:$0xff]
      %v334 = vld [vmem:[#allocation2 + $0x8] sm:$0xff]
      %v335 = vld [vmem:[#allocation2 + $0x10] sm:$0xff]
      %v336 = vld [vmem:[#allocation2 + $0x18] sm:$0xff]
      %v337 = vld [vmem:[#allocation2 + $0x20] sm:$0xff]
      %v338 = vld [vmem:[#allocation2 + $0x28] sm:$0xff]
      %v339 = vld [vmem:[#allocation2 + $0x30] sm:$0xff]
      %v340 = vld [vmem:[#allocation2 + $0x38] sm:$0xff]
      %v341 = vld [vmem:[#allocation2 + $0x40] sm:$0xff]
      %v342 = vld [vmem:[#allocation2 + $0x48] sm:$0xff]
      %v343 = vld [vmem:[#allocation2 + $0x50] sm:$0xff]
      %v344 = vld [vmem:[#allocation2 + $0x58] sm:$0xff]
      %v345 = vld [vmem:[#allocation2 + $0x60] sm:$0xff]
      %v346 = vld [vmem:[#allocation2 + $0x68] sm:$0xff]
      %v347 = vld [vmem:[#allocation2 + $0x70] sm:$0xff]
      %v348 = vld [vmem:[#allocation2 + $0x78] sm:$0xff]
      %v349 = vrot.slane %v333, 4
      %v350 = vadd.f32 %v333, %v349
      %v351 = vrot.slane %v350, 2
      %v352 = vadd.f32 %v350, %v351
      %v353 = vrot.slane %v352, 1
      %v354 = vadd.f32 %v352, %v353
      %v355 = vrot.slane %v334, 4
      %v356 = vadd.f32 %v334, %v355
      %v357 = vrot.slane %v356, 2
      %v358 = vadd.f32 %v356, %v357
      %v359 = vrot.slane %v358, 1
      %v360 = vadd.f32 %v358, %v359
      %v361 = vrot.slane %v335, 4
      %v362 = vadd.f32 %v335, %v361
      %v363 = vrot.slane %v362, 2
      %v364 = vadd.f32 %v362, %v363
      %v365 = vrot.slane %v364, 1
      %v366 = vadd.f32 %v364, %v365
      %v367 = vrot.slane %v336, 4
      %v368 = vadd.f32 %v336, %v367
      %v369 = vrot.slane %v368, 2
      %v370 = vadd.f32 %v368, %v369
      %v371 = vrot.slane %v370, 1
      %v372 = vadd.f32 %v370, %v371
      %v373 = vrot.slane %v337, 4
      %v374 = vadd.f32 %v337, %v373
      %v375 = vrot.slane %v374, 2
      %v376 = vadd.f32 %v374, %v375
      %v377 = vrot.slane %v376, 1
      %v378 = vadd.f32 %v376, %v377
      %v379 = vrot.slane %v338, 4
      %v380 = vadd.f32 %v338, %v379
      %v381 = vrot.slane %v380, 2
      %v382 = vadd.f32 %v380, %v381
      %v383 = vrot.slane %v382, 1
      %v384 = vadd.f32 %v382, %v383
      %v385 = vrot.slane %v339, 4
      %v386 = vadd.f32 %v339, %v385
      %v387 = vrot.slane %v386, 2
      %v388 = vadd.f32 %v386, %v387
      %v389 = vrot.slane %v388, 1
      %v390 = vadd.f32 %v388, %v389
      %v391 = vrot.slane %v340, 4
      %v392 = vadd.f32 %v340, %v391
      %v393 = vrot.slane %v392, 2
      %v394 = vadd.f32 %v392, %v393
      %v395 = vrot.slane %v394, 1
      %v396 = vadd.f32 %v394, %v395
      %v397 = vrot.slane %v341, 4
      %v398 = vadd.f32 %v341, %v397
      %v399 = vrot.slane %v398, 2
      %v400 = vadd.f32 %v398, %v399
      %v401 = vrot.slane %v400, 1
      %v402 = vadd.f32 %v400, %v401
      %v403 = vrot.slane %v342, 4
      %v404 = vadd.f32 %v342, %v403
      %v405 = vrot.slane %v404, 2
      %v406 = vadd.f32 %v404, %v405
      %v407 = vrot.slane %v406, 1
      %v408 = vadd.f32 %v406, %v407
      %v409 = vrot.slane %v343, 4
      %v410 = vadd.f32 %v343, %v409
      %v411 = vrot.slane %v410, 2
      %v412 = vadd.f32 %v410, %v411
      %v413 = vrot.slane %v412, 1
      %v414 = vadd.f32 %v412, %v413
      %v415 = vrot.slane %v344, 4
      %v416 = vadd.f32 %v344, %v415
      %v417 = vrot.slane %v416, 2
      %v418 = vadd.f32 %v416, %v417
      %v419 = vrot.slane %v418, 1
      %v420 = vadd.f32 %v418, %v419
      %v421 = vrot.slane %v345, 4
      %v422 = vadd.f32 %v345, %v421
      %v423 = vrot.slane %v422, 2
      %v424 = vadd.f32 %v422, %v423
      %v425 = vrot.slane %v424, 1
      %v426 = vadd.f32 %v424, %v425
      %v427 = vrot.slane %v346, 4
      %v428 = vadd.f32 %v346, %v427
      %v429 = vrot.slane %v428, 2
      %v430 = vadd.f32 %v428, %v429
      %v431 = vrot.slane %v430, 1
      %v432 = vadd.f32 %v430, %v431
      %v433 = vrot.slane %v347, 4
      %v434 = vadd.f32 %v347, %v433
      %v435 = vrot.slane %v434, 2
      %v436 = vadd.f32 %v434, %v435
      %v437 = vrot.slane %v436, 1
      %v438 = vadd.f32 %v436, %v437
      %v439 = vrot.slane %v348, 4
      %v440 = vadd.f32 %v348, %v439
      %v441 = vrot.slane %v440, 2
      %v442 = vadd.f32 %v440, %v441
      %v443 = vrot.slane %v442, 1
      %v444 = vadd.f32 %v442, %v443
      %v461 = vcombine.low %v354, %v360
      %v462 = vcombine.low %v366, %v372
      %v463 = vcombine.low %v378, %v384
      %v464 = vcombine.low %v390, %v396
      %v466 = vunpack.c.l.s4 1966171168
      %v467 = vunpack.c.0.s8 %v466
      %v468 = vlaneseq
      %v469 = vshrl.u32 %v468, 7
      %v470 = vsub.s32 %v467, %v469
      %v471 = vrot.slane %v461, %v470
      %v473 = vunpack.c.l.s4 1966171168
      %v474 = vunpack.c.0.s8 %v473
      %v475 = vlaneseq
      %v476 = vshrl.u32 %v475, 7
      %v477 = vsub.s32 %v474, %v476
      %v478 = vrot.slane %v462, %v477
      %v480 = vunpack.c.l.s4 1966171168
      %v481 = vunpack.c.0.s8 %v480
      %v482 = vlaneseq
      %v483 = vshrl.u32 %v482, 7
      %v484 = vsub.s32 %v481, %v483
      %v485 = vrot.slane %v463, %v484
      %v487 = vunpack.c.l.s4 1966171168
      %v488 = vunpack.c.0.s8 %v487
      %v489 = vlaneseq
      %v490 = vshrl.u32 %v489, 7
      %v491 = vsub.s32 %v488, %v490
      %v492 = vrot.slane %v464, %v491
      %v493 = vcombine.low %v471, %v478
      %v494 = vcombine.low %v485, %v492
      %v496 = vunpack.c.l.s4 1966171168
      %v497 = vunpack.c.0.s8 %v496
      %v498 = vlaneseq
      %v499 = vshrl.u32 %v498, 7
      %v500 = vsub.s32 %v497, %v499
      %v501 = vrot.slane %v493, %v500
      %v503 = vunpack.c.l.s4 1966171168
      %v504 = vunpack.c.0.s8 %v503
      %v505 = vlaneseq
      %v506 = vshrl.u32 %v505, 7
      %v507 = vsub.s32 %v504, %v506
      %v508 = vrot.slane %v494, %v507
      %v509 = vcombine.low %v501, %v508
      %v510 = vcombine.low %v402, %v408
      %v511 = vcombine.low %v414, %v420
      %v512 = vcombine.low %v426, %v432
      %v513 = vcombine.low %v438, %v444
      %v515 = vunpack.c.l.s4 1966171168
      %v516 = vunpack.c.0.s8 %v515
      %v517 = vlaneseq
      %v518 = vshrl.u32 %v517, 7
      %v519 = vsub.s32 %v516, %v518
      %v520 = vrot.slane %v510, %v519
      %v522 = vunpack.c.l.s4 1966171168
      %v523 = vunpack.c.0.s8 %v522
      %v524 = vlaneseq
      %v525 = vshrl.u32 %v524, 7
      %v526 = vsub.s32 %v523, %v525
      %v527 = vrot.slane %v511, %v526
      %v529 = vunpack.c.l.s4 1966171168
      %v530 = vunpack.c.0.s8 %v529
      %v531 = vlaneseq
      %v532 = vshrl.u32 %v531, 7
      %v533 = vsub.s32 %v530, %v532
      %v534 = vrot.slane %v512, %v533
      %v536 = vunpack.c.l.s4 1966171168
      %v537 = vunpack.c.0.s8 %v536
      %v538 = vlaneseq
      %v539 = vshrl.u32 %v538, 7
      %v540 = vsub.s32 %v537, %v539
      %v541 = vrot.slane %v513, %v540
      %v542 = vcombine.low %v520, %v527
      %v543 = vcombine.low %v534, %v541
      %v545 = vunpack.c.l.s4 1966171168
      %v546 = vunpack.c.0.s8 %v545
      %v547 = vlaneseq
      %v548 = vshrl.u32 %v547, 7
      %v549 = vsub.s32 %v546, %v548
      %v550 = vrot.slane %v542, %v549
      %v552 = vunpack.c.l.s4 1966171168
      %v553 = vunpack.c.0.s8 %v552
      %v554 = vlaneseq
      %v555 = vshrl.u32 %v554, 7
      %v556 = vsub.s32 %v553, %v555
      %v557 = vrot.slane %v543, %v556
      %v558 = vcombine.low %v550, %v557
      %561 = vst [vmem:[#allocation8] sm:$0xff] %v509
      %562 = vst [vmem:[#allocation8 + $0x8] sm:$0xff] %v558
    $region25: #{tpu_custom_call.1} parent=1 // pred_fallthru
      _
    // Predicated region
    $region26: #{tpu_custom_call.1} parent=1 // pred_check
      _
    $region27: #{tpu_custom_call.1} parent=1 // pred_check_branch
      %564 = sbr.rel (0) target = $region29
    $region28: #{tpu_custom_call.1} parent=1 // pred_region
      %s566 = ssub.s32 256, 256
      %567 = vsyncadd [#allocation5], %s566
      %s569 = sshll.u32 [#allocation8], 4
      %s570 = int_to_ptr.vmem [resolvable:$true] %s569
      %572 = dma.vmem_to_hbm [thread:$0]  %s570, 256, %s2, [#allocation5]
    $region29: #{tpu_custom_call.1} parent=1 // pred_fallthru
      _
    // Predicated region
    $region30: #{tpu_custom_call.1} parent=1 // pred_check
      _
    $region31: #{tpu_custom_call.1} parent=1 // pred_check_branch
      %574 = sbr.rel (0) target = $region33
    $region32: #{tpu_custom_call.1} parent=1 // pred_region
      %575 = dma.done [#allocation5], 256
    $region33: #{tpu_custom_call.1} parent=1 // pred_fallthru
      _
    %576 = vsyncpa [#allocation4], 1
    %577 = vsyncpa [#allocation7], 1
    %578 = vsyncpa [#allocation5], 1

</llo_original>
